<compile_context>
chip_gen: v5e
topology: v5e:2x2
jax: 0.10.0
libtpu: 0.0.40
codegen_flags: <defaults>
</compile_context>

<pallas_src>
import functools

import jax
import jax.numpy as jnp
from jax import lax
from jax.experimental import pallas as pl
from jax.experimental.pallas import tpu as pltpu


def _round_up(x, m):
    return (x + m - 1) // m * m


def _default_block_b():
    # Bigger tiles amortize the ~0.35us/grid-step overhead; v6e/v7x have the
    # HBM bandwidth + VMEM headroom for 1024-row tiles, older/unknown chips
    # get the conservative 512 (multiple of 128 for the 4x128 MXU on v5e).
    try:
        kind = jax.devices()[0].device_kind.lower()
    except Exception:
        return 512
    return 1024 if ("v6" in kind or "v7" in kind) else 512


_DEFAULT_BLOCK_B = _default_block_b()


# ---------------------------------------------------------------------------
# Pallas kernel: fused Linear + GELU + LayerNorm + (eval) Dropout + L2-norm
# ---------------------------------------------------------------------------
def _proj_head_kernel(x_ref, w_ref, b_ref, gamma_ref, beta_ref, o_ref):
    # f32 features are cast to bf16 in-kernel (VPU cast hides under DMA);
    # the MXU accumulates in f32.
    x = x_ref[...].astype(jnp.bfloat16)
    h = jnp.dot(x, w_ref[...], preferred_element_type=jnp.float32)  # (tb, E) f32
    h = h + b_ref[...]                                              # bias (1, E) f32

    # GELU (exact / erf variant, matching torch.nn.GELU default); f32 on VPU/EUP.
    h = 0.5 * h * (1.0 + lax.erf(h * jnp.float32(0.7071067811865476)))

    # LayerNorm over the last dim (eps = 1e-5, biased variance, torch default).
    # Single-pass mean/var: var = E[h^2] - E[h]^2 (one fewer dependent reduce).
    inv_e = jnp.float32(1.0 / h.shape[-1])
    s = jnp.sum(h, axis=-1, keepdims=True)
    ss = jnp.sum(h * h, axis=-1, keepdims=True)
    mean = s * inv_e
    var = jnp.maximum(ss * inv_e - mean * mean, 0.0)
    h = (h - mean) * lax.rsqrt(var + 1e-5)
    h = h * gamma_ref[...] + beta_ref[...]

    # Dropout(0.1): identity in eval mode (inference semantics).

    # F.normalize(dim=-1): x / max(||x||_2, 1e-12)  ==  x * rsqrt(max(sumsq, 1e-24))
    sumsq = jnp.sum(h * h, axis=-1, keepdims=True)
    h = h * lax.rsqrt(jnp.maximum(sumsq, 1e-24))

    o_ref[...] = h.astype(o_ref.dtype)


@functools.partial(jax.jit, static_argnames=("block_b",))
def projection_head(features, w, b, gamma, beta, *, block_b=_DEFAULT_BLOCK_B):
    """features: [B, D_in] f32 -> L2-normalized embeddings [B, E] (features.dtype).

    Features are streamed in their original dtype (no wrapper-side cast/pad);
    `w` may be bf16 (preferred) - the matmul accumulates in f32 on the MXU.
    """
    B, D_in = features.shape
    E = w.shape[1]

    # bf16 weight for the MXU (no-op if already bf16).
    w = w.astype(jnp.bfloat16)

    # Keep small parameters 2D (1, E) so every ref is >= 2D on TPU; f32 epilogue.
    b2 = b.reshape(1, E).astype(jnp.float32)
    g2 = gamma.reshape(1, E).astype(jnp.float32)
    bt2 = beta.reshape(1, E).astype(jnp.float32)

    # Batch tile: multiple of 8 (sublane), capped at block_b.  B need not be a
    # multiple of bb: the last grid block is partial; Pallas pads reads and
    # discards out-of-bounds rows on write-back (all kernel math is per-row).
    bb = min(block_b, _round_up(B, 8))
    grid = (pl.cdiv(B, bb),)

    itemsize = jnp.dtype(features.dtype).itemsize
    cost = pl.CostEstimate(
        flops=2 * B * D_in * E + 12 * B * E,
        transcendentals=2 * B * E,                      # erf + rsqrt per element/row
        bytes_accessed=B * D_in * itemsize + D_in * E * 2 + 3 * E * 4 + B * E * itemsize,
    )

    out = pl.pallas_call(
        _proj_head_kernel,
        out_shape=jax.ShapeDtypeStruct((B, E), features.dtype),
        grid_spec=pltpu.PrefetchScalarGridSpec(
            num_scalar_prefetch=0,
            grid=grid,
            in_specs=[
                pl.BlockSpec((bb, D_in), lambda i: (i, 0)),   # features tile (orig dtype)
                pl.BlockSpec((D_in, E), lambda i: (0, 0)),    # weight (resident, bf16)
                pl.BlockSpec((1, E), lambda i: (0, 0)),       # bias
                pl.BlockSpec((1, E), lambda i: (0, 0)),       # LN gamma
                pl.BlockSpec((1, E), lambda i: (0, 0)),       # LN beta
            ],
            out_specs=pl.BlockSpec((bb, E), lambda i: (i, 0)),
        ),
        compiler_params=pltpu.CompilerParams(
            # Batch tiles are independent -> shard across TensorCores where
            # available (v7x has 2 TCs).
            dimension_semantics=("parallel",),
            # Explicit headroom for the larger f32 feature tiles on every
            # generation (v5e scoped default 16 MiB, v7x physical 64 MiB).
            vmem_limit_bytes=48 * 1024 * 1024,
        ),
        cost_estimate=cost,
    )(features, w, b2, g2, bt2)

    return out


# ---------------------------------------------------------------------------
# DualEncoder wrapper (eval-mode forward semantics)
# ---------------------------------------------------------------------------
class DualEncoderPallas:
    VISION_INPUT_DIM = 2048   # resnet50 pooled feature dim
    TEXT_INPUT_DIM = 768      # BERT pooler_output dim

    def __init__(self, embedding_dim=256, temperature=0.05, seed=0):
        self.temperature = temperature          # stored; unused in forward (as in PyTorch)
        self.embedding_dim = embedding_dim
        key = jax.random.PRNGKey(seed)
        kv_w, kv_b, kt_w, kt_b = jax.random.split(key, 4)

        def linear_init(kw, kb, d_in, d_out):
            # deterministic, PyTorch-Linear-like uniform init
            bound = 1.0 / float(d_in) ** 0.5
            w = jax.random.uniform(kw, (d_in, d_out), jnp.float32, -bound, bound)
            b = jax.random.uniform(kb, (d_out,), jnp.float32, -bound, bound)
            # weights stored bf16 (MXU operand dtype); f32 accumulation in-kernel
            return w.astype(jnp.bfloat16), b

        # vision_projection: Linear(2048, E), GELU, LN(E), Dropout
        self.v_w, self.v_b = linear_init(kv_w, kv_b, self.VISION_INPUT_DIM, embedding_dim)
        self.v_gamma = jnp.ones((embedding_dim,), jnp.float32)
        self.v_beta = jnp.zeros((embedding_dim,), jnp.float32)

        # text_projection: Linear(768, E), GELU, LN(E), Dropout
        self.t_w, self.t_b = linear_init(kt_w, kt_b, self.TEXT_INPUT_DIM, embedding_dim)
        self.t_gamma = jnp.ones((embedding_dim,), jnp.float32)
        self.t_beta = jnp.zeros((embedding_dim,), jnp.float32)

    def __call__(self, image_features=None, text_features=None, image_only=False):
        """Mirrors DualEncoder.forward (only one branch is computed per call).

        image_features: [B, 2048]  (stands in for vision_encoder(images))
        text_features:  [B, 768]   (stands in for text_encoder(...).pooler_output)
        """
        if image_only:
            # TODO(synk): ResNet50 backbone not translated; features supplied directly.
            return projection_head(image_features, self.v_w, self.v_b,
                                   self.v_gamma, self.v_beta)
        # TODO(synk): BERT encoder + pooler not translated; pooled features supplied directly.
        return projection_head(text_features, self.t_w, self.t_b,
                               self.t_gamma, self.t_beta)


# ---------------------------------------------------------------------------
# Pure-JAX reference (same bf16-rounded operands, f32 math) for validation
# ---------------------------------------------------------------------------
def _reference_head(features, w, b, gamma, beta):
    x = features.astype(jnp.bfloat16).astype(jnp.float32)
    wf = w.astype(jnp.float32)
    h = x @ wf + b
    h = 0.5 * h * (1.0 + lax.erf(h / jnp.sqrt(2.0)))
    mean = h.mean(-1, keepdims=True)
    var = ((h - mean) ** 2).mean(-1, keepdims=True)
    h = (h - mean) / jnp.sqrt(var + 1e-5) * gamma + beta
    n = jnp.linalg.norm(h, axis=-1, keepdims=True)
    return h / jnp.maximum(n, 1e-12)


if __name__ == "__main__":
    model = DualEncoderPallas(embedding_dim=256, temperature=0.05, seed=0)

    key = jax.random.PRNGKey(0)
    k_img, k_txt = jax.random.split(key)
    B = 6   # small batch, deliberately not a multiple of 8 to exercise the partial tile
    vision_features = jax.random.normal(
        k_img, (B, DualEncoderPallas.VISION_INPUT_DIM), jnp.float32)
    text_features = jax.random.normal(
        k_txt, (B, DualEncoderPallas.TEXT_INPUT_DIM), jnp.float32)

    # Text branch (default path of the PyTorch forward)
    text_emb = model(text_features=text_features, image_only=False)
    # Image branch (image_only=True path)
    img_emb = model(image_features=vision_features, image_only=True)
    jax.block_until_ready((text_emb, img_emb))

    # sanity: shapes, finiteness, unit L2 norm per row
    assert text_emb.shape == (B, 256) and img_emb.shape == (B, 256)
    assert bool(jnp.all(jnp.isfinite(text_emb))) and bool(jnp.all(jnp.isfinite(img_emb)))
    tn = jnp.linalg.norm(text_emb, axis=-1)
    vn = jnp.linalg.norm(img_emb, axis=-1)
    assert bool(jnp.all(jnp.abs(tn - 1.0) < 1e-3)) and bool(jnp.all(jnp.abs(vn - 1.0) < 1e-3))

    # numerics vs pure-JAX reference (same bf16-rounded operands)
    t_ref = _reference_head(text_features, model.t_w, model.t_b,
                            model.t_gamma, model.t_beta)
    v_ref = _reference_head(vision_features, model.v_w, model.v_b,
                            model.v_gamma, model.v_beta)
    assert bool(jnp.allclose(text_emb, t_ref, atol=1e-2))
    assert bool(jnp.allclose(img_emb, v_ref, atol=1e-2))

    print("KERNEL_OK")
</pallas_src>

<mosaic_0001>
module attributes {stable_mosaic.version = 11 : i64} {
  func.func @_proj_head_kernel(%arg0: i32, %arg1: memref<8x768xf32, #tpu.memory_space<vmem>>, %arg2: memref<768x256xbf16, #tpu.memory_space<vmem>>, %arg3: memref<1x256xf32, #tpu.memory_space<vmem>>, %arg4: memref<1x256xf32, #tpu.memory_space<vmem>>, %arg5: memref<1x256xf32, #tpu.memory_space<vmem>>, %arg6: memref<8x256xf32, #tpu.memory_space<vmem>>) attributes {dimension_semantics = [#tpu.dimension_semantics<parallel>], iteration_bounds = array<i64: 1>, scalar_prefetch = 0 : i64, scratch_operands = 0 : i64, tpu.core_type = #tpu.core_type<tc>, window_params = [{transform_indices = @transform_0, window_bounds = array<i64: 8, 768>}, {pipeline_mode = #tpu.pipeline_mode<synchronous>, transform_indices = @transform_1, window_bounds = array<i64: 768, 256>}, {pipeline_mode = #tpu.pipeline_mode<synchronous>, transform_indices = @transform_2, window_bounds = array<i64: 1, 256>}, {pipeline_mode = #tpu.pipeline_mode<synchronous>, transform_indices = @transform_3, window_bounds = array<i64: 1, 256>}, {pipeline_mode = #tpu.pipeline_mode<synchronous>, transform_indices = @transform_4, window_bounds = array<i64: 1, 256>}, {transform_indices = @transform_5, window_bounds = array<i64: 8, 256>}]} {
    %c0 = arith.constant 0 : index
    %c0_0 = arith.constant 0 : index
    %0 = vector.load %arg1[%c0, %c0_0] : memref<8x768xf32, #tpu.memory_space<vmem>>, vector<8x768xf32>
    %1 = arith.truncf %0 : vector<8x768xf32> to vector<8x768xbf16>
    %c0_1 = arith.constant 0 : index
    %c0_2 = arith.constant 0 : index
    %2 = vector.load %arg2[%c0_1, %c0_2] : memref<768x256xbf16, #tpu.memory_space<vmem>>, vector<768x256xbf16>
    %cst = arith.constant dense<0.000000e+00> : vector<8x256xf32>
    %3 = tpu.matmul %1, %2, %cst {dimension_numbers = #tpu.dot_dimension_numbers<[1], [0], [0], [1], [0, 0, 1, 1], [], []>} : vector<8x768xbf16>, vector<768x256xbf16>, vector<8x256xf32> -> vector<8x256xf32>
    %c0_3 = arith.constant 0 : index
    %c0_4 = arith.constant 0 : index
    %4 = vector.load %arg3[%c0_3, %c0_4] : memref<1x256xf32, #tpu.memory_space<vmem>>, vector<1x256xf32>
    %5 = vector.broadcast %4 : vector<1x256xf32> to vector<8x256xf32>
    %6 = arith.addf %3, %5 : vector<8x256xf32>
    %cst_5 = arith.constant 5.000000e-01 : f32
    %7 = vector.broadcast %cst_5 : f32 to vector<8x256xf32>
    %8 = arith.mulf %7, %6 : vector<8x256xf32>
    %cst_6 = arith.constant 0.707106769 : f32
    %9 = vector.broadcast %cst_6 : f32 to vector<8x256xf32>
    %10 = arith.mulf %6, %9 : vector<8x256xf32>
    %11 = math.erf %10 : vector<8x256xf32>
    %cst_7 = arith.constant 1.000000e+00 : f32
    %12 = vector.broadcast %cst_7 : f32 to vector<8x256xf32>
    %13 = arith.addf %12, %11 : vector<8x256xf32>
    %14 = arith.mulf %8, %13 : vector<8x256xf32>
    %cst_8 = arith.constant dense<0.000000e+00> : vector<8xf32>
    %15 = vector.multi_reduction <add>, %14, %cst_8 [1] : vector<8x256xf32> to vector<8xf32>
    %16 = vector.shape_cast %15 : vector<8xf32> to vector<8x1xf32>
    %17 = arith.mulf %14, %14 : vector<8x256xf32>
    %cst_9 = arith.constant dense<0.000000e+00> : vector<8xf32>
    %18 = vector.multi_reduction <add>, %17, %cst_9 [1] : vector<8x256xf32> to vector<8xf32>
    %19 = vector.shape_cast %18 : vector<8xf32> to vector<8x1xf32>
    %cst_10 = arith.constant 3.906250e-03 : f32
    %20 = vector.broadcast %cst_10 : f32 to vector<8x1xf32>
    %21 = arith.mulf %16, %20 : vector<8x1xf32>
    %cst_11 = arith.constant 3.906250e-03 : f32
    %22 = vector.broadcast %cst_11 : f32 to vector<8x1xf32>
    %23 = arith.mulf %19, %22 : vector<8x1xf32>
    %24 = arith.mulf %21, %21 : vector<8x1xf32>
    %25 = arith.subf %23, %24 : vector<8x1xf32>
    %cst_12 = arith.constant 0.000000e+00 : f32
    %26 = vector.broadcast %cst_12 : f32 to vector<8x1xf32>
    %27 = arith.maximumf %25, %26 : vector<8x1xf32>
    %28 = vector.broadcast %21 : vector<8x1xf32> to vector<8x256xf32>
    %29 = arith.subf %14, %28 : vector<8x256xf32>
    %cst_13 = arith.constant 9.99999974E-6 : f32
    %30 = vector.broadcast %cst_13 : f32 to vector<8x1xf32>
    %31 = arith.addf %27, %30 : vector<8x1xf32>
    %32 = math.rsqrt %31 : vector<8x1xf32>
    %33 = vector.broadcast %32 : vector<8x1xf32> to vector<8x256xf32>
    %34 = arith.mulf %29, %33 : vector<8x256xf32>
    %c0_14 = arith.constant 0 : index
    %c0_15 = arith.constant 0 : index
    %35 = vector.load %arg4[%c0_14, %c0_15] : memref<1x256xf32, #tpu.memory_space<vmem>>, vector<1x256xf32>
    %36 = vector.broadcast %35 : vector<1x256xf32> to vector<8x256xf32>
    %37 = arith.mulf %34, %36 : vector<8x256xf32>
    %c0_16 = arith.constant 0 : index
    %c0_17 = arith.constant 0 : index
    %38 = vector.load %arg5[%c0_16, %c0_17] : memref<1x256xf32, #tpu.memory_space<vmem>>, vector<1x256xf32>
    %39 = vector.broadcast %38 : vector<1x256xf32> to vector<8x256xf32>
    %40 = arith.addf %37, %39 : vector<8x256xf32>
    %41 = arith.mulf %40, %40 : vector<8x256xf32>
    %cst_18 = arith.constant dense<0.000000e+00> : vector<8xf32>
    %42 = vector.multi_reduction <add>, %41, %cst_18 [1] : vector<8x256xf32> to vector<8xf32>
    %43 = vector.shape_cast %42 : vector<8xf32> to vector<8x1xf32>
    %cst_19 = arith.constant 1.000000e-24 : f32
    %44 = vector.broadcast %cst_19 : f32 to vector<8x1xf32>
    %45 = arith.maximumf %43, %44 : vector<8x1xf32>
    %46 = math.rsqrt %45 : vector<8x1xf32>
    %47 = vector.broadcast %46 : vector<8x1xf32> to vector<8x256xf32>
    %48 = arith.mulf %40, %47 : vector<8x256xf32>
    %c0_20 = arith.constant 0 : index
    %c0_21 = arith.constant 0 : index
    %49 = vector.load %arg6[%c0_20, %c0_21] : memref<8x256xf32, #tpu.memory_space<vmem>>, vector<8x256xf32>
    tpu.vector_store %arg6[%c0_20, %c0_21], %48 {strides = array<i32>} : memref<8x256xf32, #tpu.memory_space<vmem>>, vector<8x256xf32>,
    return
  }
  func.func @transform_0(%arg0: i32) -> (i32, i32) {
    %c0_i32 = arith.constant 0 : i32
    %c0_i32_0 = arith.constant 0 : i32
    return %arg0, %c0_i32 : i32, i32
  }
  func.func @transform_1(%arg0: i32) -> (i32, i32) {
    %c0_i32 = arith.constant 0 : i32
    %c0_i32_0 = arith.constant 0 : i32
    %c0_i32_1 = arith.constant 0 : i32
    return %c0_i32, %c0_i32_0 : i32, i32
  }
  func.func @transform_2(%arg0: i32) -> (i32, i32) {
    %c0_i32 = arith.constant 0 : i32
    %c0_i32_0 = arith.constant 0 : i32
    %c0_i32_1 = arith.constant 0 : i32
    return %c0_i32, %c0_i32_0 : i32, i32
  }
  func.func @transform_3(%arg0: i32) -> (i32, i32) {
    %c0_i32 = arith.constant 0 : i32
    %c0_i32_0 = arith.constant 0 : i32
    %c0_i32_1 = arith.constant 0 : i32
    return %c0_i32, %c0_i32_0 : i32, i32
  }
  func.func @transform_4(%arg0: i32) -> (i32, i32) {
    %c0_i32 = arith.constant 0 : i32
    %c0_i32_0 = arith.constant 0 : i32
    %c0_i32_1 = arith.constant 0 : i32
    return %c0_i32, %c0_i32_0 : i32, i32
  }
  func.func @transform_5(%arg0: i32) -> (i32, i32) {
    %c0_i32 = arith.constant 0 : i32
    %c0_i32_0 = arith.constant 0 : i32
    return %arg0, %c0_i32 : i32, i32
  }
}

</mosaic_0001>

<llo_original>
// kernel: projection_head.1
$region0: #{projection_head.1}
  #allocation0 [shape = 'u32[]', space=smem, size = 0x4, offset = 0x4, fixed_abs, tag = 'smem constant byte address 0x4 - core index']
  #allocation1 [shape = 'u32[72,128]{1,0:T(1,128)}', space=vmem, size = 0x9000, scoped, tag = 'internal scratch']
  %s0 = inlined_call_operand.hbm [shape: f32[6,768], index: 0, kind: input, shape index: {}]
  %s1 = inlined_call_operand.hbm [shape: bf16[768,256], index: 1, kind: input, shape index: {}]
  %s2 = inlined_call_operand.vmem [shape: f32[1,256], index: 2, kind: input, shape index: {}]
  %s3 = inlined_call_operand.vmem [shape: f32[1,256], index: 3, kind: input, shape index: {}]
  %s4 = inlined_call_operand.vmem [shape: f32[1,256], index: 4, kind: input, shape index: {}]
  %s5 = inlined_call_operand.hbm [shape: f32[6,256], index: 5, kind: output, shape index: {}]
  %s6 = sld [smem:[#allocation0]]
  $region38: #{projection_head.1} parent=0
    _
  %s8 = ssub.s32 1, %s6
  %s9 = scalar_select 0, %s8, %s6
  $region1: #{projection_head.1} parent=0
    #allocation2 [shape = 'u8[24576]{0}', space=vmem, size = 0x6000, scoped, tag = 'input window, operand 0, single buffered']
    #allocation3 [shape = 's32[1]{0}', space=sflag, size = 0x4, scoped, tag = 'scoped memory for projection_head.1']
    #allocation4 [shape = 's32[1]{0}', space=sflag, size = 0x4, scoped, tag = 'scoped memory for projection_head.1']
    #allocation5 [shape = 'u8[393216]{0}', space=vmem, size = 0x60000, scoped, tag = 'input window, operand 1, single buffered']
    #allocation6 [shape = 's32[1]{0}', space=sflag, size = 0x4, scoped, tag = 'scoped memory for projection_head.1']
    #allocation7 [shape = 'u8[8192]{0}', space=vmem, size = 0x2000, scoped, tag = 'output window, operand 0, single buffered']
    %10 = vsyncpa [#allocation3], 0
    %11 = vsyncpa [#allocation6], 0
    %12 = vsyncpa [#allocation4], 0
    // Predicated region
    $region2: #{projection_head.1} parent=1 // pred_check
      _
    $region3: #{projection_head.1} parent=1 // pred_check_branch
      %14 = sbr.rel (0) target = $region5
    $region4: #{projection_head.1} parent=1 // pred_region
      %16 = vsyncadd [#allocation3], 0
      %s18 = sshll.u32 %s0, 4
      %s19 = int_to_ptr.hbm [resolvable:$true] %s18
      %s20 = sshll.u32 [#allocation2], 4
      %s21 = int_to_ptr.vmem [resolvable:$true] %s20
      %23 = dma.hbm_to_vmem [thread:$0]  %s19, 768, %s21, [#allocation3]
    $region5: #{projection_head.1} parent=1 // pred_fallthru
      _
    // Predicated region
    $region6: #{projection_head.1} parent=1 // pred_check
      _
    $region7: #{projection_head.1} parent=1 // pred_check_branch
      %25 = sbr.rel (0) target = $region9
    $region8: #{projection_head.1} parent=1 // pred_region
      %27 = vsyncadd [#allocation6], 0
      %s28 = sshll.u32 %s1, 4
      %s29 = int_to_ptr.hbm [resolvable:$true] %s28
      %s30 = sshll.u32 [#allocation5], 4
      %s31 = int_to_ptr.vmem [resolvable:$true] %s30
      %36 = dma.hbm_to_vmem [thread:$0]  %s29, 12288, %s31, [#allocation6], 128, 128, 8
    $region9: #{projection_head.1} parent=1 // pred_fallthru
      _
    // Predicated region
    $region10: #{projection_head.1} parent=1 // pred_check
      _
    $region11: #{projection_head.1} parent=1 // pred_check_branch
      %38 = sbr.rel (0) target = $region13
    $region12: #{projection_head.1} parent=1 // pred_region
      _
    $region13: #{projection_head.1} parent=1 // pred_fallthru
      _
    // Predicated region
    $region14: #{projection_head.1} parent=1 // pred_check
      _
    $region15: #{projection_head.1} parent=1 // pred_check_branch
      %40 = sbr.rel (0) target = $region17
    $region16: #{projection_head.1} parent=1 // pred_region
      _
    $region17: #{projection_head.1} parent=1 // pred_fallthru
      _
    // Predicated region
    $region18: #{projection_head.1} parent=1 // pred_check
      _
    $region19: #{projection_head.1} parent=1 // pred_check_branch
      %42 = sbr.rel (0) target = $region21
    $region20: #{projection_head.1} parent=1 // pred_region
      _
    $region21: #{projection_head.1} parent=1 // pred_fallthru
      _
    // Predicated region
    $region22: #{projection_head.1} parent=1 // pred_check
      _
    $region23: #{projection_head.1} parent=1 // pred_check_branch
      %44 = sbr.rel (0) target = $region25
    $region24: #{projection_head.1} parent=1 // pred_region
      %46 = dma.done [#allocation3], 768
    $region25: #{projection_head.1} parent=1 // pred_fallthru
      _
    // Predicated region
    $region26: #{projection_head.1} parent=1 // pred_check
      _
    $region27: #{projection_head.1} parent=1 // pred_check_branch
      %48 = sbr.rel (0) target = $region29
    $region28: #{projection_head.1} parent=1 // pred_region
      %50 = dma.done [#allocation6], 12288
    $region29: #{projection_head.1} parent=1 // pred_fallthru
      _
    %v51 = vld [vmem:[#allocation2] sm:$0xff]
    %v52 = vld [vmem:[#allocation2 + $0x8] sm:$0xff]
    %v53 = vld [vmem:[#allocation2 + $0x10] sm:$0xff]
    %v54 = vld [vmem:[#allocation2 + $0x18] sm:$0xff]
    %v55 = vld [vmem:[#allocation2 + $0x20] sm:$0xff]
    %v56 = vld [vmem:[#allocation2 + $0x28] sm:$0xff]
    %v57 = vpack.c.bf16 %v51, %v51
    %v58 = vpack.c.bf16 %v52, %v52
    %v59 = vpack.c.bf16 %v53, %v53
    %v60 = vpack.c.bf16 %v54, %v54
    %v61 = vpack.c.bf16 %v55, %v55
    %v62 = vpack.c.bf16 %v56, %v56
    %v63 = vld [vmem:[#allocation5] sm:$0xff]
    %v64 = vld [vmem:[#allocation5 + $0x8] sm:$0xff]
    %v65 = vld [vmem:[#allocation5 + $0x10] sm:$0xff]
    %v66 = vld [vmem:[#allocation5 + $0x18] sm:$0xff]
    %v67 = vld [vmem:[#allocation5 + $0x20] sm:$0xff]
    %v68 = vld [vmem:[#allocation5 + $0x28] sm:$0xff]
    %v69 = vld [vmem:[#allocation5 + $0x30] sm:$0xff]
    %v70 = vld [vmem:[#allocation5 + $0x38] sm:$0xff]
    %v71 = vld [vmem:[#allocation5 + $0x40] sm:$0xff]
    %v72 = vld [vmem:[#allocation5 + $0x48] sm:$0xff]
    %v73 = vld [vmem:[#allocation5 + $0x50] sm:$0xff]
    %v74 = vld [vmem:[#allocation5 + $0x58] sm:$0xff]
    %v75 = vld [vmem:[#allocation5 + $0x60] sm:$0xff]
    %v76 = vld [vmem:[#allocation5 + $0x68] sm:$0xff]
    %v77 = vld [vmem:[#allocation5 + $0x70] sm:$0xff]
    %v78 = vld [vmem:[#allocation5 + $0x78] sm:$0xff]
    %v79 = vld [vmem:[#allocation5 + $0x80] sm:$0xff]
    %v80 = vld [vmem:[#allocation5 + $0x88] sm:$0xff]
    %v81 = vld [vmem:[#allocation5 + $0x90] sm:$0xff]
    %v82 = vld [vmem:[#allocation5 + $0x98] sm:$0xff]
    %v83 = vld [vmem:[#allocation5 + $0xa0] sm:$0xff]
    %v84 = vld [vmem:[#allocation5 + $0xa8] sm:$0xff]
    %v85 = vld [vmem:[#allocation5 + $0xb0] sm:$0xff]
    %v86 = vld [vmem:[#allocation5 + $0xb8] sm:$0xff]
    %v87 = vld [vmem:[#allocation5 + $0xc0] sm:$0xff]
    %v88 = vld [vmem:[#allocation5 + $0xc8] sm:$0xff]
    %v89 = vld [vmem:[#allocation5 + $0xd0] sm:$0xff]
    %v90 = vld [vmem:[#allocation5 + $0xd8] sm:$0xff]
    %v91 = vld [vmem:[#allocation5 + $0xe0] sm:$0xff]
    %v92 = vld [vmem:[#allocation5 + $0xe8] sm:$0xff]
    %v93 = vld [vmem:[#allocation5 + $0xf0] sm:$0xff]
    %v94 = vld [vmem:[#allocation5 + $0xf8] sm:$0xff]
    %v95 = vld [vmem:[#allocation5 + $0x100] sm:$0xff]
    %v96 = vld [vmem:[#allocation5 + $0x108] sm:$0xff]
    %v97 = vld [vmem:[#allocation5 + $0x110] sm:$0xff]
    %v98 = vld [vmem:[#allocation5 + $0x118] sm:$0xff]
    %v99 = vld [vmem:[#allocation5 + $0x120] sm:$0xff]
    %v100 = vld [vmem:[#allocation5 + $0x128] sm:$0xff]
    %v101 = vld [vmem:[#allocation5 + $0x130] sm:$0xff]
    %v102 = vld [vmem:[#allocation5 + $0x138] sm:$0xff]
    %v103 = vld [vmem:[#allocation5 + $0x140] sm:$0xff]
    %v104 = vld [vmem:[#allocation5 + $0x148] sm:$0xff]
    %v105 = vld [vmem:[#allocation5 + $0x150] sm:$0xff]
    %v106 = vld [vmem:[#allocation5 + $0x158] sm:$0xff]
    %v107 = vld [vmem:[#allocation5 + $0x160] sm:$0xff]
    %v108 = vld [vmem:[#allocation5 + $0x168] sm:$0xff]
    %v109 = vld [vmem:[#allocation5 + $0x170] sm:$0xff]
    %v110 = vld [vmem:[#allocation5 + $0x178] sm:$0xff]
    %v111 = vld [vmem:[#allocation5 + $0x180] sm:$0xff]
    %v112 = vld [vmem:[#allocation5 + $0x188] sm:$0xff]
    %v113 = vld [vmem:[#allocation5 + $0x190] sm:$0xff]
    %v114 = vld [vmem:[#allocation5 + $0x198] sm:$0xff]
    %v115 = vld [vmem:[#allocation5 + $0x1a0] sm:$0xff]
    %v116 = vld [vmem:[#allocation5 + $0x1a8] sm:$0xff]
    %v117 = vld [vmem:[#allocation5 + $0x1b0] sm:$0xff]
    %v118 = vld [vmem:[#allocation5 + $0x1b8] sm:$0xff]
    %v119 = vld [vmem:[#allocation5 + $0x1c0] sm:$0xff]
    %v120 = vld [vmem:[#allocation5 + $0x1c8] sm:$0xff]
    %v121 = vld [vmem:[#allocation5 + $0x1d0] sm:$0xff]
    %v122 = vld [vmem:[#allocation5 + $0x1d8] sm:$0xff]
    %v123 = vld [vmem:[#allocation5 + $0x1e0] sm:$0xff]
    %v124 = vld [vmem:[#allocation5 + $0x1e8] sm:$0xff]
    %v125 = vld [vmem:[#allocation5 + $0x1f0] sm:$0xff]
    %v126 = vld [vmem:[#allocation5 + $0x1f8] sm:$0xff]
    %v127 = vld [vmem:[#allocation5 + $0x200] sm:$0xff]
    %v128 = vld [vmem:[#allocation5 + $0x208] sm:$0xff]
    %v129 = vld [vmem:[#allocation5 + $0x210] sm:$0xff]
    %v130 = vld [vmem:[#allocation5 + $0x218] sm:$0xff]
    %v131 = vld [vmem:[#allocation5 + $0x220] sm:$0xff]
    %v132 = vld [vmem:[#allocation5 + $0x228] sm:$0xff]
    %v133 = vld [vmem:[#allocation5 + $0x230] sm:$0xff]
    %v134 = vld [vmem:[#allocation5 + $0x238] sm:$0xff]
    %v135 = vld [vmem:[#allocation5 + $0x240] sm:$0xff]
    %v136 = vld [vmem:[#allocation5 + $0x248] sm:$0xff]
    %v137 = vld [vmem:[#allocation5 + $0x250] sm:$0xff]
    %v138 = vld [vmem:[#allocation5 + $0x258] sm:$0xff]
    %v139 = vld [vmem:[#allocation5 + $0x260] sm:$0xff]
    %v140 = vld [vmem:[#allocation5 + $0x268] sm:$0xff]
    %v141 = vld [vmem:[#allocation5 + $0x270] sm:$0xff]
    %v142 = vld [vmem:[#allocation5 + $0x278] sm:$0xff]
    %v143 = vld [vmem:[#allocation5 + $0x280] sm:$0xff]
    %v144 = vld [vmem:[#allocation5 + $0x288] sm:$0xff]
    %v145 = vld [vmem:[#allocation5 + $0x290] sm:$0xff]
    %v146 = vld [vmem:[#allocation5 + $0x298] sm:$0xff]
    %v147 = vld [vmem:[#allocation5 + $0x2a0] sm:$0xff]
    %v148 = vld [vmem:[#allocation5 + $0x2a8] sm:$0xff]
    %v149 = vld [vmem:[#allocation5 + $0x2b0] sm:$0xff]
    %v150 = vld [vmem:[#allocation5 + $0x2b8] sm:$0xff]
    %v151 = vld [vmem:[#allocation5 + $0x2c0] sm:$0xff]
    %v152 = vld [vmem:[#allocation5 + $0x2c8] sm:$0xff]
    %v153 = vld [vmem:[#allocation5 + $0x2d0] sm:$0xff]
    %v154 = vld [vmem:[#allocation5 + $0x2d8] sm:$0xff]
    %v155 = vld [vmem:[#allocation5 + $0x2e0] sm:$0xff]
    %v156 = vld [vmem:[#allocation5 + $0x2e8] sm:$0xff]
    %v157 = vld [vmem:[#allocation5 + $0x2f0] sm:$0xff]
    %v158 = vld [vmem:[#allocation5 + $0x2f8] sm:$0xff]
    %v159 = vld [vmem:[%s2] sm:$0x3]
    %v161 = vperm.slane %v159, 0
    %v162 = vperm.slane %v159, 1
    %v261 = vunpack.c.l.b16 %v63
    %v262 = vunpack.c.h.b16 %v63
    %v263 = vunpack.c.l.b16 %v64
    %v264 = vunpack.c.h.b16 %v64
    %v265 = vunpack.c.l.b16 %v65
    %v266 = vunpack.c.h.b16 %v65
    %v267 = vunpack.c.l.b16 %v66
    %v268 = vunpack.c.h.b16 %v66
    %v269 = vunpack.c.l.b16 %v67
    %v270 = vunpack.c.h.b16 %v67
    %v271 = vunpack.c.l.b16 %v68
    %v272 = vunpack.c.h.b16 %v68
    %v273 = vunpack.c.l.b16 %v69
    %v274 = vunpack.c.h.b16 %v69
    %v275 = vunpack.c.l.b16 %v70
    %v276 = vunpack.c.h.b16 %v70
    %v277 = vunpack.c.l.b16 %v71
    %v278 = vunpack.c.h.b16 %v71
    %v279 = vunpack.c.l.b16 %v72
    %v280 = vunpack.c.h.b16 %v72
    %v281 = vunpack.c.l.b16 %v73
    %v282 = vunpack.c.h.b16 %v73
    %v283 = vunpack.c.l.b16 %v74
    %v284 = vunpack.c.h.b16 %v74
    %v285 = vunpack.c.l.b16 %v75
    %v286 = vunpack.c.h.b16 %v75
    %v287 = vunpack.c.l.b16 %v76
    %v288 = vunpack.c.h.b16 %v76
    %v289 = vunpack.c.l.b16 %v77
    %v290 = vunpack.c.h.b16 %v77
    %v291 = vunpack.c.l.b16 %v78
    %v292 = vunpack.c.h.b16 %v78
    %v293 = vunpack.c.l.b16 %v79
    %v294 = vunpack.c.h.b16 %v79
    %v295 = vunpack.c.l.b16 %v80
    %v296 = vunpack.c.h.b16 %v80
    %v297 = vunpack.c.l.b16 %v81
    %v298 = vunpack.c.h.b16 %v81
    %v299 = vunpack.c.l.b16 %v82
    %v300 = vunpack.c.h.b16 %v82
    %v301 = vunpack.c.l.b16 %v83
    %v302 = vunpack.c.h.b16 %v83
    %v303 = vunpack.c.l.b16 %v84
    %v304 = vunpack.c.h.b16 %v84
    %v305 = vunpack.c.l.b16 %v85
    %v306 = vunpack.c.h.b16 %v85
    %v307 = vunpack.c.l.b16 %v86
    %v308 = vunpack.c.h.b16 %v86
    %v309 = vunpack.c.l.b16 %v87
    %v310 = vunpack.c.h.b16 %v87
    %v311 = vunpack.c.l.b16 %v88
    %v312 = vunpack.c.h.b16 %v88
    %v313 = vunpack.c.l.b16 %v89
    %v314 = vunpack.c.h.b16 %v89
    %v315 = vunpack.c.l.b16 %v90
    %v316 = vunpack.c.h.b16 %v90
    %v317 = vunpack.c.l.b16 %v91
    %v318 = vunpack.c.h.b16 %v91
    %v319 = vunpack.c.l.b16 %v92
    %v320 = vunpack.c.h.b16 %v92
    %v321 = vunpack.c.l.b16 %v93
    %v322 = vunpack.c.h.b16 %v93
    %v323 = vunpack.c.l.b16 %v94
    %v324 = vunpack.c.h.b16 %v94
    %v325 = vunpack.c.l.b16 %v95
    %v326 = vunpack.c.h.b16 %v95
    %v327 = vunpack.c.l.b16 %v96
    %v328 = vunpack.c.h.b16 %v96
    %v329 = vunpack.c.l.b16 %v97
    %v330 = vunpack.c.h.b16 %v97
    %v331 = vunpack.c.l.b16 %v98
    %v332 = vunpack.c.h.b16 %v98
    %v333 = vunpack.c.l.b16 %v99
    %v334 = vunpack.c.h.b16 %v99
    %v335 = vunpack.c.l.b16 %v100
    %v336 = vunpack.c.h.b16 %v100
    %v337 = vunpack.c.l.b16 %v101
    %v338 = vunpack.c.h.b16 %v101
    %v339 = vunpack.c.l.b16 %v102
    %v340 = vunpack.c.h.b16 %v102
    %v341 = vunpack.c.l.b16 %v103
    %v342 = vunpack.c.h.b16 %v103
    %v343 = vunpack.c.l.b16 %v104
    %v344 = vunpack.c.h.b16 %v104
    %v345 = vunpack.c.l.b16 %v105
    %v346 = vunpack.c.h.b16 %v105
    %v347 = vunpack.c.l.b16 %v106
    %v348 = vunpack.c.h.b16 %v106
    %v349 = vunpack.c.l.b16 %v107
    %v350 = vunpack.c.h.b16 %v107
    %v351 = vunpack.c.l.b16 %v108
    %v352 = vunpack.c.h.b16 %v108
    %v353 = vunpack.c.l.b16 %v109
    %v354 = vunpack.c.h.b16 %v109
    %v355 = vunpack.c.l.b16 %v110
    %v356 = vunpack.c.h.b16 %v110
    %v357 = vunpack.c.l.b16 %v111
    %v358 = vunpack.c.h.b16 %v111
    %v359 = vunpack.c.l.b16 %v112
    %v360 = vunpack.c.h.b16 %v112
    %v361 = vunpack.c.l.b16 %v113
    %v362 = vunpack.c.h.b16 %v113
    %v363 = vunpack.c.l.b16 %v114
    %v364 = vunpack.c.h.b16 %v114
    %v365 = vunpack.c.l.b16 %v115
    %v366 = vunpack.c.h.b16 %v115
    %v367 = vunpack.c.l.b16 %v116
    %v368 = vunpack.c.h.b16 %v116
    %v369 = vunpack.c.l.b16 %v117
    %v370 = vunpack.c.h.b16 %v117
    %v371 = vunpack.c.l.b16 %v118
    %v372 = vunpack.c.h.b16 %v118
    %v373 = vunpack.c.l.b16 %v119
    %v374 = vunpack.c.h.b16 %v119
    %v375 = vunpack.c.l.b16 %v120
    %v376 = vunpack.c.h.b16 %v120
    %v377 = vunpack.c.l.b16 %v121
    %v378 = vunpack.c.h.b16 %v121
    %v379 = vunpack.c.l.b16 %v122
    %v380 = vunpack.c.h.b16 %v122
    %v381 = vunpack.c.l.b16 %v123
    %v382 = vunpack.c.h.b16 %v123
    %v383 = vunpack.c.l.b16 %v124
    %v384 = vunpack.c.h.b16 %v124
    %v385 = vunpack.c.l.b16 %v125
    %v386 = vunpack.c.h.b16 %v125
    %v387 = vunpack.c.l.b16 %v126
    %v388 = vunpack.c.h.b16 %v126
    %v389 = vunpack.c.l.b16 %v127
    %v390 = vunpack.c.h.b16 %v127
    %v391 = vunpack.c.l.b16 %v128
    %v392 = vunpack.c.h.b16 %v128
    %v393 = vunpack.c.l.b16 %v129
    %v394 = vunpack.c.h.b16 %v129
    %v395 = vunpack.c.l.b16 %v130
    %v396 = vunpack.c.h.b16 %v130
    %v397 = vunpack.c.l.b16 %v131
    %v398 = vunpack.c.h.b16 %v131
    %v399 = vunpack.c.l.b16 %v132
    %v400 = vunpack.c.h.b16 %v132
    %v401 = vunpack.c.l.b16 %v133
    %v402 = vunpack.c.h.b16 %v133
    %v403 = vunpack.c.l.b16 %v134
    %v404 = vunpack.c.h.b16 %v134
    %v405 = vunpack.c.l.b16 %v135
    %v406 = vunpack.c.h.b16 %v135
    %v407 = vunpack.c.l.b16 %v136
    %v408 = vunpack.c.h.b16 %v136
    %v409 = vunpack.c.l.b16 %v137
    %v410 = vunpack.c.h.b16 %v137
    %v411 = vunpack.c.l.b16 %v138
    %v412 = vunpack.c.h.b16 %v138
    %v413 = vunpack.c.l.b16 %v139
    %v414 = vunpack.c.h.b16 %v139
    %v415 = vunpack.c.l.b16 %v140
    %v416 = vunpack.c.h.b16 %v140
    %v417 = vunpack.c.l.b16 %v141
    %v418 = vunpack.c.h.b16 %v141
    %v419 = vunpack.c.l.b16 %v142
    %v420 = vunpack.c.h.b16 %v142
    %v421 = vunpack.c.l.b16 %v143
    %v422 = vunpack.c.h.b16 %v143
    %v423 = vunpack.c.l.b16 %v144
    %v424 = vunpack.c.h.b16 %v144
    %v425 = vunpack.c.l.b16 %v145
    %v426 = vunpack.c.h.b16 %v145
    %v427 = vunpack.c.l.b16 %v146
    %v428 = vunpack.c.h.b16 %v146
    %v429 = vunpack.c.l.b16 %v147
    %v430 = vunpack.c.h.b16 %v147
    %v431 = vunpack.c.l.b16 %v148
    %v432 = vunpack.c.h.b16 %v148
    %v433 = vunpack.c.l.b16 %v149
    %v434 = vunpack.c.h.b16 %v149
    %v435 = vunpack.c.l.b16 %v150
    %v436 = vunpack.c.h.b16 %v150
    %v437 = vunpack.c.l.b16 %v151
    %v438 = vunpack.c.h.b16 %v151
    %v439 = vunpack.c.l.b16 %v152
    %v440 = vunpack.c.h.b16 %v152
    %v441 = vunpack.c.l.b16 %v153
    %v442 = vunpack.c.h.b16 %v153
    %v443 = vunpack.c.l.b16 %v154
    %v444 = vunpack.c.h.b16 %v154
    %v445 = vunpack.c.l.b16 %v155
    %v446 = vunpack.c.h.b16 %v155
    %v447 = vunpack.c.l.b16 %v156
    %v448 = vunpack.c.h.b16 %v156
    %v449 = vunpack.c.l.b16 %v157
    %v450 = vunpack.c.h.b16 %v157
    %v451 = vunpack.c.l.b16 %v158
    %v452 = vunpack.c.h.b16 %v158
    %v453 = vpack.c.b16 %v263, %v261
    %v454 = vpack.c.b16 %v264, %v262
    %v455 = vpack.c.b16 %v267, %v265
    %v456 = vpack.c.b16 %v268, %v266
    %v457 = vpack.c.b16 %v271, %v269
    %v458 = vpack.c.b16 %v272, %v270
    %v459 = vpack.c.b16 %v275, %v273
    %v460 = vpack.c.b16 %v276, %v274
    %v461 = vpack.c.b16 %v279, %v277
    %v462 = vpack.c.b16 %v280, %v278
    %v463 = vpack.c.b16 %v283, %v281
    %v464 = vpack.c.b16 %v284, %v282
    %v465 = vpack.c.b16 %v287, %v285
    %v466 = vpack.c.b16 %v288, %v286
    %v467 = vpack.c.b16 %v291, %v289
    %v468 = vpack.c.b16 %v292, %v290
    %v469 = vpack.c.b16 %v295, %v293
    %v470 = vpack.c.b16 %v296, %v294
    %v471 = vpack.c.b16 %v299, %v297
    %v472 = vpack.c.b16 %v300, %v298
    %v473 = vpack.c.b16 %v303, %v301
    %v474 = vpack.c.b16 %v304, %v302
    %v475 = vpack.c.b16 %v307, %v305
    %v476 = vpack.c.b16 %v308, %v306
    %v477 = vpack.c.b16 %v311, %v309
    %v478 = vpack.c.b16 %v312, %v310
    %v479 = vpack.c.b16 %v315, %v313
    %v480 = vpack.c.b16 %v316, %v314
    %v481 = vpack.c.b16 %v319, %v317
    %v482 = vpack.c.b16 %v320, %v318
    %v483 = vpack.c.b16 %v323, %v321
    %v484 = vpack.c.b16 %v324, %v322
    %v485 = vpack.c.b16 %v327, %v325
    %v486 = vpack.c.b16 %v328, %v326
    %v487 = vpack.c.b16 %v331, %v329
    %v488 = vpack.c.b16 %v332, %v330
    %v489 = vpack.c.b16 %v335, %v333
    %v490 = vpack.c.b16 %v336, %v334
    %v491 = vpack.c.b16 %v339, %v337
    %v492 = vpack.c.b16 %v340, %v338
    %v493 = vpack.c.b16 %v343, %v341
    %v494 = vpack.c.b16 %v344, %v342
    %v495 = vpack.c.b16 %v347, %v345
    %v496 = vpack.c.b16 %v348, %v346
    %v497 = vpack.c.b16 %v351, %v349
    %v498 = vpack.c.b16 %v352, %v350
    %v499 = vpack.c.b16 %v355, %v353
    %v500 = vpack.c.b16 %v356, %v354
    %v501 = vpack.c.b16 %v359, %v357
    %v502 = vpack.c.b16 %v360, %v358
    %v503 = vpack.c.b16 %v363, %v361
    %v504 = vpack.c.b16 %v364, %v362
    %v505 = vpack.c.b16 %v367, %v365
    %v506 = vpack.c.b16 %v368, %v366
    %v507 = vpack.c.b16 %v371, %v369
    %v508 = vpack.c.b16 %v372, %v370
    %v509 = vpack.c.b16 %v375, %v373
    %v510 = vpack.c.b16 %v376, %v374
    %v511 = vpack.c.b16 %v379, %v377
    %v512 = vpack.c.b16 %v380, %v378
    %v513 = vpack.c.b16 %v383, %v381
    %v514 = vpack.c.b16 %v384, %v382
    %v515 = vpack.c.b16 %v387, %v385
    %v516 = vpack.c.b16 %v388, %v386
    %v517 = vpack.c.b16 %v391, %v389
    %v518 = vpack.c.b16 %v392, %v390
    %v519 = vpack.c.b16 %v395, %v393
    %v520 = vpack.c.b16 %v396, %v394
    %v521 = vpack.c.b16 %v399, %v397
    %v522 = vpack.c.b16 %v400, %v398
    %v523 = vpack.c.b16 %v403, %v401
    %v524 = vpack.c.b16 %v404, %v402
    %v525 = vpack.c.b16 %v407, %v405
    %v526 = vpack.c.b16 %v408, %v406
    %v527 = vpack.c.b16 %v411, %v409
    %v528 = vpack.c.b16 %v412, %v410
    %v529 = vpack.c.b16 %v415, %v413
    %v530 = vpack.c.b16 %v416, %v414
    %v531 = vpack.c.b16 %v419, %v417
    %v532 = vpack.c.b16 %v420, %v418
    %v533 = vpack.c.b16 %v423, %v421
    %v534 = vpack.c.b16 %v424, %v422
    %v535 = vpack.c.b16 %v427, %v425
    %v536 = vpack.c.b16 %v428, %v426
    %v537 = vpack.c.b16 %v431, %v429
    %v538 = vpack.c.b16 %v432, %v430
    %v539 = vpack.c.b16 %v435, %v433
    %v540 = vpack.c.b16 %v436, %v434
    %v541 = vpack.c.b16 %v439, %v437
    %v542 = vpack.c.b16 %v440, %v438
    %v543 = vpack.c.b16 %v443, %v441
    %v544 = vpack.c.b16 %v444, %v442
    %v545 = vpack.c.b16 %v447, %v445
    %v546 = vpack.c.b16 %v448, %v446
    %v547 = vpack.c.b16 %v451, %v449
    %v548 = vpack.c.b16 %v452, %v450
    %645 = vmatpush.bf16.msra.mxu0 %v467
    %646 = vmatpush.bf16.msra.mxu0 %v465
    %647 = vmatpush.bf16.msra.mxu0 %v463
    %648 = vmatpush.bf16.msra.mxu0 %v461
    %649 = vmatpush.bf16.msra.mxu0 %v459
    %650 = vmatpush.bf16.msra.mxu0 %v457
    %651 = vmatpush.bf16.msra.mxu0 %v455
    %652 = vmatpush.bf16.msra.mxu0 %v453
    %653 = vmatmul.bf16.gmra.mxu0 %v57
    %v654 = vpop.f32.mrf.mxu0
    %v655 = vadd.f32 %v161, %v654
    %v656 = vpop.f32.mrf.mxu0
    %657 = vdwg.mxu0
    %658 = vmatpush.bf16.msra.mxu0 %v483
    %659 = vmatpush.bf16.msra.mxu0 %v481
    %660 = vmatpush.bf16.msra.mxu0 %v479
    %661 = vmatpush.bf16.msra.mxu0 %v477
    %662 = vmatpush.bf16.msra.mxu0 %v475
    %663 = vmatpush.bf16.msra.mxu0 %v473
    %664 = vmatpush.bf16.msra.mxu0 %v471
    %665 = vmatpush.bf16.msra.mxu0 %v469
    %666 = vmatmul.bf16.gmra.mxu0 %v58
    %v667 = vpop.f32.mrf.mxu0
    %v668 = vadd.f32 %v655, %v667
    %v669 = vpop.f32.mrf.mxu0
    %670 = vdwg.mxu0
    %671 = vmatpush.bf16.msra.mxu0 %v499
    %672 = vmatpush.bf16.msra.mxu0 %v497
    %673 = vmatpush.bf16.msra.mxu0 %v495
    %674 = vmatpush.bf16.msra.mxu0 %v493
    %675 = vmatpush.bf16.msra.mxu0 %v491
    %676 = vmatpush.bf16.msra.mxu0 %v489
    %677 = vmatpush.bf16.msra.mxu0 %v487
    %678 = vmatpush.bf16.msra.mxu0 %v485
    %679 = vmatmul.bf16.gmra.mxu0 %v59
    %v680 = vpop.f32.mrf.mxu0
    %v681 = vadd.f32 %v668, %v680
    %v682 = vpop.f32.mrf.mxu0
    %683 = vdwg.mxu0
    %684 = vmatpush.bf16.msra.mxu0 %v515
    %685 = vmatpush.bf16.msra.mxu0 %v513
    %686 = vmatpush.bf16.msra.mxu0 %v511
    %687 = vmatpush.bf16.msra.mxu0 %v509
    %688 = vmatpush.bf16.msra.mxu0 %v507
    %689 = vmatpush.bf16.msra.mxu0 %v505
    %690 = vmatpush.bf16.msra.mxu0 %v503
    %691 = vmatpush.bf16.msra.mxu0 %v501
    %692 = vmatmul.bf16.gmra.mxu0 %v60
    %v693 = vpop.f32.mrf.mxu0
    %v694 = vadd.f32 %v681, %v693
    %v695 = vpop.f32.mrf.mxu0
    %696 = vdwg.mxu0
    %697 = vmatpush.bf16.msra.mxu0 %v531
    %698 = vmatpush.bf16.msra.mxu0 %v529
    %699 = vmatpush.bf16.msra.mxu0 %v527
    %700 = vmatpush.bf16.msra.mxu0 %v525
    %701 = vmatpush.bf16.msra.mxu0 %v523
    %702 = vmatpush.bf16.msra.mxu0 %v521
    %703 = vmatpush.bf16.msra.mxu0 %v519
    %704 = vmatpush.bf16.msra.mxu0 %v517
    %705 = vmatmul.bf16.gmra.mxu0 %v61
    %v706 = vpop.f32.mrf.mxu0
    %v707 = vadd.f32 %v694, %v706
    %v708 = vpop.f32.mrf.mxu0
    %709 = vdwg.mxu0
    %710 = vmatpush.bf16.msra.mxu0 %v547
    %711 = vmatpush.bf16.msra.mxu0 %v545
    %712 = vmatpush.bf16.msra.mxu0 %v543
    %713 = vmatpush.bf16.msra.mxu0 %v541
    %714 = vmatpush.bf16.msra.mxu0 %v539
    %715 = vmatpush.bf16.msra.mxu0 %v537
    %716 = vmatpush.bf16.msra.mxu0 %v535
    %717 = vmatpush.bf16.msra.mxu0 %v533
    %718 = vmatmul.bf16.gmra.mxu0 %v62
    %v719 = vpop.f32.mrf.mxu0
    %v720 = vadd.f32 %v707, %v719
    %v721 = vpop.f32.mrf.mxu0
    %722 = vdwg.mxu0
    %723 = vmatpush.bf16.msra.mxu0 %v468
    %724 = vmatpush.bf16.msra.mxu0 %v466
    %725 = vmatpush.bf16.msra.mxu0 %v464
    %726 = vmatpush.bf16.msra.mxu0 %v462
    %727 = vmatpush.bf16.msra.mxu0 %v460
    %728 = vmatpush.bf16.msra.mxu0 %v458
    %729 = vmatpush.bf16.msra.mxu0 %v456
    %730 = vmatpush.bf16.msra.mxu0 %v454
    %731 = vmatmul.bf16.gmra.mxu0 %v57
    %v732 = vpop.f32.mrf.mxu0
    %v733 = vadd.f32 %v162, %v732
    %v734 = vpop.f32.mrf.mxu0
    %735 = vdwg.mxu0
    %736 = vmatpush.bf16.msra.mxu0 %v484
    %737 = vmatpush.bf16.msra.mxu0 %v482
    %738 = vmatpush.bf16.msra.mxu0 %v480
    %739 = vmatpush.bf16.msra.mxu0 %v478
    %740 = vmatpush.bf16.msra.mxu0 %v476
    %741 = vmatpush.bf16.msra.mxu0 %v474
    %742 = vmatpush.bf16.msra.mxu0 %v472
    %743 = vmatpush.bf16.msra.mxu0 %v470
    %744 = vmatmul.bf16.gmra.mxu0 %v58
    %v745 = vpop.f32.mrf.mxu0
    %v746 = vadd.f32 %v733, %v745
    %v747 = vpop.f32.mrf.mxu0
    %748 = vdwg.mxu0
    %749 = vmatpush.bf16.msra.mxu0 %v500
    %750 = vmatpush.bf16.msra.mxu0 %v498
    %751 = vmatpush.bf16.msra.mxu0 %v496
    %752 = vmatpush.bf16.msra.mxu0 %v494
    %753 = vmatpush.bf16.msra.mxu0 %v492
    %754 = vmatpush.bf16.msra.mxu0 %v490
    %755 = vmatpush.bf16.msra.mxu0 %v488
    %756 = vmatpush.bf16.msra.mxu0 %v486
    %757 = vmatmul.bf16.gmra.mxu0 %v59
    %v758 = vpop.f32.mrf.mxu0
    %v759 = vadd.f32 %v746, %v758
    %v760 = vpop.f32.mrf.mxu0
    %761 = vdwg.mxu0
    %762 = vmatpush.bf16.msra.mxu0 %v516
    %763 = vmatpush.bf16.msra.mxu0 %v514
    %764 = vmatpush.bf16.msra.mxu0 %v512
    %765 = vmatpush.bf16.msra.mxu0 %v510
    %766 = vmatpush.bf16.msra.mxu0 %v508
    %767 = vmatpush.bf16.msra.mxu0 %v506
    %768 = vmatpush.bf16.msra.mxu0 %v504
    %769 = vmatpush.bf16.msra.mxu0 %v502
    %770 = vmatmul.bf16.gmra.mxu0 %v60
    %v771 = vpop.f32.mrf.mxu0
    %v772 = vadd.f32 %v759, %v771
    %v773 = vpop.f32.mrf.mxu0
    %774 = vdwg.mxu0
    %775 = vmatpush.bf16.msra.mxu0 %v532
    %776 = vmatpush.bf16.msra.mxu0 %v530
    %777 = vmatpush.bf16.msra.mxu0 %v528
    %778 = vmatpush.bf16.msra.mxu0 %v526
    %779 = vmatpush.bf16.msra.mxu0 %v524
    %780 = vmatpush.bf16.msra.mxu0 %v522
    %781 = vmatpush.bf16.msra.mxu0 %v520
    %782 = vmatpush.bf16.msra.mxu0 %v518
    %783 = vmatmul.bf16.gmra.mxu0 %v61
    %v784 = vpop.f32.mrf.mxu0
    %v785 = vadd.f32 %v772, %v784
    %v786 = vpop.f32.mrf.mxu0
    %787 = vdwg.mxu0
    %788 = vmatpush.bf16.msra.mxu0 %v548
    %789 = vmatpush.bf16.msra.mxu0 %v546
    %790 = vmatpush.bf16.msra.mxu0 %v544
    %791 = vmatpush.bf16.msra.mxu0 %v542
    %792 = vmatpush.bf16.msra.mxu0 %v540
    %793 = vmatpush.bf16.msra.mxu0 %v538
    %794 = vmatpush.bf16.msra.mxu0 %v536
    %795 = vmatpush.bf16.msra.mxu0 %v534
    %796 = vmatmul.bf16.gmra.mxu0 %v62
    %v797 = vpop.f32.mrf.mxu0
    %v798 = vadd.f32 %v785, %v797
    %v799 = vpop.f32.mrf.mxu0
    %800 = vdwg.mxu0
    %v801 = vmul.f32 %v720, 0.5
    %v802 = vmul.f32 %v798, 0.5
    %v803 = vmul.f32 %v720, 0.70710677
    %v804 = vmul.f32 %v798, 0.70710677
    %v805 = vmul.f32 %v803, %v803
    %v806 = vmin.f32 16.0, %v805
    %v807 = vmul.f32 %v806, 2.1237322e-06
    %v808 = vadd.f32 %v807, 0.00028619796
    %v809 = vmul.f32 %v806, %v808
    %v810 = vadd.f32 %v809, 0.0036580483
    %v811 = vmul.f32 %v806, %v810
    %v812 = vadd.f32 %v811, 0.05243302
    %v813 = vmul.f32 %v806, %v812
    %v814 = vadd.f32 %v813, 0.18741608
    %v815 = vmul.f32 %v806, %v814
    %v816 = vadd.f32 %v815, 1.1283791
    %v817 = vmul.f32 %v803, %v816
    %v818 = vmul.f32 %v806, 3.8918573e-05
    %v819 = vadd.f32 %v818, 0.001143296
    %v820 = vmul.f32 %v806, %v819
    %v821 = vadd.f32 %v820, 0.014752088
    %v822 = vmul.f32 %v806, %v821
    %v823 = vadd.f32 %v822, 0.112945676
    %v824 = vmul.f32 %v806, %v823
    %v825 = vadd.f32 %v824, 0.4994258
    %v826 = vmul.f32 %v806, %v825
    %v827 = vadd.f32 %v826, 1.0
    %v828 = vrcp.pop %v827
    %v829 = vmul.f32 %v827, %v828
    %v830 = vsub.f32 1.0, %v829
    %v831 = vmul.f32 %v828, %v830
    %v832 = vadd.f32 %v828, %v831
    %vm833 = vweird.f32 %v827
    %vm834 = vweird.f32 %v828
    %vm835 = vmor %vm833, %vm834
    %v836 = vsel %vm835, %v828, %v832
    %v837 = vand.u32 2147483647, %v827
    %vm838 = vcmp.eq.f32.partialorder %v837, 8.507059e+37
    %v839 = vand.u32 %v827, 2147483648
    %v840 = vor.u32 1.1754944e-38, %v839
    %v841 = vsel %vm838, %v840, %v836
    %v842 = vmul.f32 %v817, %v841
    %v843 = vmin.f32 %v842, 1.0
    %v844 = vmax.f32 %v843, -1.0
    %v845 = vmul.f32 %v804, %v804
    %v846 = vmin.f32 16.0, %v845
    %v847 = vmul.f32 %v846, 2.1237322e-06
    %v848 = vadd.f32 %v847, 0.00028619796
    %v849 = vmul.f32 %v846, %v848
    %v850 = vadd.f32 %v849, 0.0036580483
    %v851 = vmul.f32 %v846, %v850
    %v852 = vadd.f32 %v851, 0.05243302
    %v853 = vmul.f32 %v846, %v852
    %v854 = vadd.f32 %v853, 0.18741608
    %v855 = vmul.f32 %v846, %v854
    %v856 = vadd.f32 %v855, 1.1283791
    %v857 = vmul.f32 %v804, %v856
    %v858 = vmul.f32 %v846, 3.8918573e-05
    %v859 = vadd.f32 %v858, 0.001143296
    %v860 = vmul.f32 %v846, %v859
    %v861 = vadd.f32 %v860, 0.014752088
    %v862 = vmul.f32 %v846, %v861
    %v863 = vadd.f32 %v862, 0.112945676
    %v864 = vmul.f32 %v846, %v863
    %v865 = vadd.f32 %v864, 0.4994258
    %v866 = vmul.f32 %v846, %v865
    %v867 = vadd.f32 %v866, 1.0
    %v868 = vrcp.pop %v867
    %v869 = vmul.f32 %v867, %v868
    %v870 = vsub.f32 1.0, %v869
    %v871 = vmul.f32 %v868, %v870
    %v872 = vadd.f32 %v868, %v871
    %vm873 = vweird.f32 %v867
    %vm874 = vweird.f32 %v868
    %vm875 = vmor %vm873, %vm874
    %v876 = vsel %vm875, %v868, %v872
    %v877 = vand.u32 2147483647, %v867
    %vm878 = vcmp.eq.f32.partialorder %v877, 8.507059e+37
    %v879 = vand.u32 %v867, 2147483648
    %v880 = vor.u32 1.1754944e-38, %v879
    %v881 = vsel %vm878, %v880, %v876
    %v882 = vmul.f32 %v857, %v881
    %v883 = vmin.f32 %v882, 1.0
    %v884 = vmax.f32 %v883, -1.0
    %v885 = vadd.f32 %v844, 1.0
    %v886 = vadd.f32 %v884, 1.0
    %v887 = vmul.f32 %v801, %v885
    %v888 = vmul.f32 %v802, %v886
    %v889 = vadd.f32 %v887, %v888
    %890 = vadd.xlane.f32.xlu0 %v889
    %v891 = vpop.xlane.xlu0 %890
    %v892 = vmul.f32 %v887, %v887
    %v893 = vmul.f32 %v888, %v888
    %v894 = vadd.f32 %v892, %v893
    %895 = vadd.xlane.f32.xlu0 %v894
    %v896 = vpop.xlane.xlu0 %895
    %v897 = vmul.f32 %v891, 0.00390625
    %v898 = vmul.f32 %v896, 0.00390625
    %v899 = vmul.f32 %v897, %v897
    %v900 = vsub.f32 %v898, %v899
    %v901 = vmax.f32 %v900, 0.0
    %v902 = vsub.f32 %v887, %v897
    %v903 = vsub.f32 %v888, %v897
    %v904 = vadd.f32 %v901, 1e-05
    %v905 = vrsqrt.pop %v904
    %v906 = vmul.f32 %v905, %v904
    %v907 = vmul.f32 %v906, %v905
    %v908 = vmul.f32 0.5, %v907
    %v909 = vsub.f32 1.5, %v908
    %v910 = vmul.f32 %v905, %v909
    %vm911 = vweird.f32 %v904
    %vm912 = vweird.f32 %v905
    %vm913 = vmor %vm911, %vm912
    %v914 = vsel %vm913, %v905, %v910
    %v915 = vmul.f32 %v902, %v914
    %v916 = vmul.f32 %v903, %v914
    %v917 = vld [vmem:[%s3] sm:$0x3]
    %v919 = vperm.slane %v917, 0
    %v920 = vperm.slane %v917, 1
    %v923 = vmul.f32 %v915, %v919
    %v924 = vmul.f32 %v916, %v920
    %v925 = vld [vmem:[%s4] sm:$0x3]
    %v927 = vperm.slane %v925, 0
    %v928 = vperm.slane %v925, 1
    %v931 = vadd.f32 %v923, %v927
    %v932 = vadd.f32 %v924, %v928
    %v933 = vmul.f32 %v931, %v931
    %v934 = vmul.f32 %v932, %v932
    %v935 = vadd.f32 %v933, %v934
    %936 = vadd.xlane.f32.xlu0 %v935
    %v937 = vpop.xlane.xlu0 %936
    %v938 = vmax.f32 %v937, 1e-24
    %v939 = vrsqrt.pop %v938
    %v940 = vmul.f32 %v939, %v938
    %v941 = vmul.f32 %v940, %v939
    %v942 = vmul.f32 0.5, %v941
    %v943 = vsub.f32 1.5, %v942
    %v944 = vmul.f32 %v939, %v943
    %vm945 = vweird.f32 %v938
    %vm946 = vweird.f32 %v939
    %vm947 = vmor %vm945, %vm946
    %v948 = vsel %vm947, %v939, %v944
    %v949 = vmul.f32 %v931, %v948
    %v950 = vmul.f32 %v932, %v948
    %951 = vst [vmem:[#allocation7] sm:$0xff] %v949
    %952 = vst [vmem:[#allocation7 + $0x8] sm:$0xff] %v950
    // Predicated region
    $region30: #{projection_head.1} parent=1 // pred_check
      _
    $region31: #{projection_head.1} parent=1 // pred_check_branch
      %954 = sbr.rel (0) target = $region33
    $region32: #{projection_head.1} parent=1 // pred_region
      %956 = vsyncadd [#allocation4], 0
      %s958 = sshll.u32 [#allocation7], 4
      %s959 = int_to_ptr.vmem [resolvable:$true] %s958
      %s960 = sshll.u32 %s5, 4
      %s961 = int_to_ptr.hbm [resolvable:$true] %s960
      %963 = dma.vmem_to_hbm [thread:$0]  %s959, 256, %s961, [#allocation4]
    $region33: #{projection_head.1} parent=1 // pred_fallthru
      _
    // Predicated region
    $region34: #{projection_head.1} parent=1 // pred_check
      _
    $region35: #{projection_head.1} parent=1 // pred_check_branch
      %965 = sbr.rel (0) target = $region37
    $region36: #{projection_head.1} parent=1 // pred_region
      %967 = dma.done [#allocation4], 256
    $region37: #{projection_head.1} parent=1 // pred_fallthru
      _
    %968 = vsyncpa [#allocation3], 1
    %969 = vsyncpa [#allocation6], 1
    %970 = vsyncpa [#allocation4], 1

</llo_original>
